<compile_context>
chip_gen: v7x
topology: tpu7x:2x2x1
jax: 0.10.0
libtpu: 0.0.40
codegen_flags: <defaults>
</compile_context>

<pallas_src>
import jax
import jax.numpy as jnp
from jax.experimental import pallas as pl
from jax.experimental.pallas import tpu as pltpu

LANE = 128


def fcnn_kernel(x_ref, w1_ref, b1_ref, w2_ref, b2_ref, w3_ref, b3_ref, o_ref):
    # x: (TB, K) f32 | w1: (K, 128) f32 | w2: (128, 64) bf16 | w3: (64, 128) bf16
    x = x_ref[...]
    w1 = w1_ref[...]
    k_in = x.shape[1]

    # ---- fc1 on the VPU: K is tiny (6) so a handful of broadcast FMAs beats a
    #      (mostly empty) MXU pass. Unrolled at trace time.
    h1 = x[:, 0:1] * w1[0:1, :]
    for k in range(1, k_in):
        h1 = h1 + x[:, k:k + 1] * w1[k:k + 1, :]
    h1 = jnp.maximum(h1 + b1_ref[...], 0.0)          # bias + ReLU in f32

    # dropout(p=0.3): identity in eval mode.
    # TODO(synk): training-mode dropout (prng mask + 1/(1-p) scaling) omitted.

    # ---- fc2 + ReLU: bf16 MXU inputs, f32 accumulation / elementwise.
    h2 = jnp.dot(h1.astype(jnp.bfloat16), w2_ref[...],
                 preferred_element_type=jnp.float32) + b2_ref[...]
    h2 = jnp.maximum(h2, 0.0)

    # ---- fc3 (lane-padded to 128 outputs; real logits are the first 26 lanes).
    o_ref[...] = jnp.dot(h2.astype(jnp.bfloat16), w3_ref[...],
                         preferred_element_type=jnp.float32) + b3_ref[...]


def fcnn_forward(x, params, *, block_b=1024):
    """x: (B, input_size) float32; params: dict of (in, out) weights + biases."""
    x = jnp.asarray(x, jnp.float32)
    B, K = x.shape

    w1 = jnp.asarray(params["w1"], jnp.float32)                 # (K, 128)
    b1 = jnp.asarray(params["b1"], jnp.float32).reshape(1, -1)  # (1, 128)
    w2 = jnp.asarray(params["w2"], jnp.bfloat16)                # (128, 64)
    b2 = jnp.asarray(params["b2"], jnp.float32).reshape(1, -1)  # (1, 64)
    w3 = jnp.asarray(params["w3"], jnp.float32)                 # (64, C)
    b3 = jnp.asarray(params["b3"], jnp.float32).reshape(1, -1)  # (1, C)
    C = w3.shape[1]

    # Pad the last layer to a lane-dense width (avoids masked vst / partial DMA).
    c_pad = pl.cdiv(C, LANE) * LANE
    w3p = jnp.zeros((w3.shape[0], c_pad), jnp.float32).at[:, :C].set(w3)
    w3p = w3p.astype(jnp.bfloat16)
    b3p = jnp.zeros((1, c_pad), jnp.float32).at[:, :C].set(b3)

    # Batch tiling: pipelined grid over the batch. For small B, shrink the tile
    # (keeping sublane-multiple-of-8) so we don't pad a tiny batch to 1024 rows.
    tb = min(block_b, max(8, pl.cdiv(B, 8) * 8))
    b_pad = pl.cdiv(B, tb) * tb
    if b_pad != B:
        x = jnp.pad(x, ((0, b_pad - B), (0, 0)))
    grid = (b_pad // tb,)

    def const_spec(a):
        return pl.BlockSpec(a.shape, lambda i: (0,) * a.ndim)

    flops = 2 * b_pad * (K * 128 + 128 * 64 + 64 * c_pad)
    bytes_accessed = (x.size * 4 + w1.size * 4 + b1.size * 4 + w2.size * 2
                      + b2.size * 4 + w3p.size * 2 + b3p.size * 4
                      + b_pad * c_pad * 4)

    out = pl.pallas_call(
        fcnn_kernel,
        out_shape=jax.ShapeDtypeStruct((b_pad, c_pad), jnp.float32),
        grid=grid,
        in_specs=[
            pl.BlockSpec((tb, K), lambda i: (i, 0)),   # x: tiled over batch
            const_spec(w1), const_spec(b1),            # weights: VMEM-resident
            const_spec(w2), const_spec(b2),
            const_spec(w3p), const_spec(b3p),
        ],
        out_specs=pl.BlockSpec((tb, c_pad), lambda i: (i, 0)),
        compiler_params=pltpu.CompilerParams(
            dimension_semantics=("parallel",)),        # v7x: split batch on 2 TCs
        cost_estimate=pl.CostEstimate(flops=int(flops), transcendentals=0,
                                      bytes_accessed=int(bytes_accessed)),
    )(x, w1, b1, w2, b2, w3p, b3p)

    return out[:B, :C]


def init_params(key, input_size=6, num_classes=26):
    """Deterministic init mimicking PyTorch nn.Linear default:
       U(-1/sqrt(fan_in), 1/sqrt(fan_in)); weights stored as (in, out)."""
    def linear(k, fan_in, fan_out):
        kw, kb = jax.random.split(k)
        bound = 1.0 / jnp.sqrt(fan_in)
        w = jax.random.uniform(kw, (fan_in, fan_out), jnp.float32, -bound, bound)
        b = jax.random.uniform(kb, (1, fan_out), jnp.float32, -bound, bound)
        return w, b

    k1, k2, k3 = jax.random.split(key, 3)
    w1, b1 = linear(k1, input_size, 128)
    w2, b2 = linear(k2, 128, 64)
    w3, b3 = linear(k3, 64, num_classes)
    return {"w1": w1, "b1": b1, "w2": w2, "b2": b2, "w3": w3, "b3": b3}


def fcnn_reference_f32(x, p):
    h1 = jnp.maximum(x @ p["w1"] + p["b1"], 0.0)
    h2 = jnp.maximum(h1 @ p["w2"] + p["b2"], 0.0)
    return h2 @ p["w3"] + p["b3"]


def fcnn_reference_bf16(x, p):
    # Matches kernel numerics: f32 fc1, bf16 matmul inputs + f32 accum for fc2/fc3.
    h1 = jnp.maximum(x @ p["w1"] + p["b1"], 0.0)
    h2 = jnp.dot(h1.astype(jnp.bfloat16), p["w2"].astype(jnp.bfloat16),
                 preferred_element_type=jnp.float32) + p["b2"]
    h2 = jnp.maximum(h2, 0.0)
    return jnp.dot(h2.astype(jnp.bfloat16), p["w3"].astype(jnp.bfloat16),
                   preferred_element_type=jnp.float32) + p["b3"]


if __name__ == "__main__":
    key = jax.random.PRNGKey(0)
    k_params, k_x1, k_x2 = jax.random.split(key, 3)

    input_size, num_classes = 6, 26
    params = init_params(k_params, input_size, num_classes)

    # Small batch (single tile).
    B1 = 8
    x1 = jax.random.normal(k_x1, (B1, input_size), jnp.float32)
    out1 = jax.block_until_ready(fcnn_forward(x1, params))
    assert out1.shape == (B1, num_classes), out1.shape
    assert jnp.allclose(out1, fcnn_reference_bf16(x1, params), atol=1e-2, rtol=1e-2)
    assert jnp.allclose(out1, fcnn_reference_f32(x1, params), atol=7e-2, rtol=7e-2)

    # Larger, non-multiple-of-tile batch (exercises grid pipelining + padding).
    B2 = 300
    x2 = jax.random.normal(k_x2, (B2, input_size), jnp.float32)
    out2 = jax.block_until_ready(fcnn_forward(x2, params, block_b=128))
    assert out2.shape == (B2, num_classes), out2.shape
    assert jnp.allclose(out2, fcnn_reference_bf16(x2, params), atol=1e-2, rtol=1e-2)
    assert jnp.allclose(out2, fcnn_reference_f32(x2, params), atol=7e-2, rtol=7e-2)

    print("KERNEL_OK")
</pallas_src>

<mosaic_0001>
module attributes {stable_mosaic.version = 11 : i64} {
  func.func @fcnn_kernel(%arg0: i32, %arg1: memref<8x6xf32, #tpu.memory_space<vmem>>, %arg2: memref<6x128xf32, #tpu.memory_space<vmem>>, %arg3: memref<1x128xf32, #tpu.memory_space<vmem>>, %arg4: memref<128x64xbf16, #tpu.memory_space<vmem>>, %arg5: memref<1x64xf32, #tpu.memory_space<vmem>>, %arg6: memref<64x128xbf16, #tpu.memory_space<vmem>>, %arg7: memref<1x128xf32, #tpu.memory_space<vmem>>, %arg8: memref<8x128xf32, #tpu.memory_space<vmem>>) attributes {dimension_semantics = [#tpu.dimension_semantics<parallel>], iteration_bounds = array<i64: 1>, scalar_prefetch = 0 : i64, scratch_operands = 0 : i64, tpu.core_type = #tpu.core_type<tc>, window_params = [{transform_indices = @transform_0, window_bounds = array<i64: 8, 6>}, {pipeline_mode = #tpu.pipeline_mode<synchronous>, transform_indices = @transform_1, window_bounds = array<i64: 6, 128>}, {pipeline_mode = #tpu.pipeline_mode<synchronous>, transform_indices = @transform_2, window_bounds = array<i64: 1, 128>}, {pipeline_mode = #tpu.pipeline_mode<synchronous>, transform_indices = @transform_3, window_bounds = array<i64: 128, 64>}, {pipeline_mode = #tpu.pipeline_mode<synchronous>, transform_indices = @transform_4, window_bounds = array<i64: 1, 64>}, {pipeline_mode = #tpu.pipeline_mode<synchronous>, transform_indices = @transform_5, window_bounds = array<i64: 64, 128>}, {pipeline_mode = #tpu.pipeline_mode<synchronous>, transform_indices = @transform_6, window_bounds = array<i64: 1, 128>}, {transform_indices = @transform_7, window_bounds = array<i64: 8, 128>}]} {
    %c0 = arith.constant 0 : index
    %c0_0 = arith.constant 0 : index
    %0 = vector.load %arg1[%c0, %c0_0] : memref<8x6xf32, #tpu.memory_space<vmem>>, vector<8x6xf32>
    %c0_1 = arith.constant 0 : index
    %c0_2 = arith.constant 0 : index
    %1 = vector.load %arg2[%c0_1, %c0_2] : memref<6x128xf32, #tpu.memory_space<vmem>>, vector<6x128xf32>
    %2 = vector.extract_strided_slice %0 {offsets = [0, 0], sizes = [8, 1], strides = [1, 1]} : vector<8x6xf32> to vector<8x1xf32>
    %3 = vector.extract_strided_slice %1 {offsets = [0, 0], sizes = [1, 128], strides = [1, 1]} : vector<6x128xf32> to vector<1x128xf32>
    %4 = vector.broadcast %2 : vector<8x1xf32> to vector<8x128xf32>
    %5 = vector.broadcast %3 : vector<1x128xf32> to vector<8x128xf32>
    %6 = arith.mulf %4, %5 : vector<8x128xf32>
    %7 = vector.extract_strided_slice %0 {offsets = [0, 1], sizes = [8, 1], strides = [1, 1]} : vector<8x6xf32> to vector<8x1xf32>
    %8 = vector.extract_strided_slice %1 {offsets = [1, 0], sizes = [1, 128], strides = [1, 1]} : vector<6x128xf32> to vector<1x128xf32>
    %9 = vector.broadcast %7 : vector<8x1xf32> to vector<8x128xf32>
    %10 = vector.broadcast %8 : vector<1x128xf32> to vector<8x128xf32>
    %11 = arith.mulf %9, %10 : vector<8x128xf32>
    %12 = arith.addf %6, %11 : vector<8x128xf32>
    %13 = vector.extract_strided_slice %0 {offsets = [0, 2], sizes = [8, 1], strides = [1, 1]} : vector<8x6xf32> to vector<8x1xf32>
    %14 = vector.extract_strided_slice %1 {offsets = [2, 0], sizes = [1, 128], strides = [1, 1]} : vector<6x128xf32> to vector<1x128xf32>
    %15 = vector.broadcast %13 : vector<8x1xf32> to vector<8x128xf32>
    %16 = vector.broadcast %14 : vector<1x128xf32> to vector<8x128xf32>
    %17 = arith.mulf %15, %16 : vector<8x128xf32>
    %18 = arith.addf %12, %17 : vector<8x128xf32>
    %19 = vector.extract_strided_slice %0 {offsets = [0, 3], sizes = [8, 1], strides = [1, 1]} : vector<8x6xf32> to vector<8x1xf32>
    %20 = vector.extract_strided_slice %1 {offsets = [3, 0], sizes = [1, 128], strides = [1, 1]} : vector<6x128xf32> to vector<1x128xf32>
    %21 = vector.broadcast %19 : vector<8x1xf32> to vector<8x128xf32>
    %22 = vector.broadcast %20 : vector<1x128xf32> to vector<8x128xf32>
    %23 = arith.mulf %21, %22 : vector<8x128xf32>
    %24 = arith.addf %18, %23 : vector<8x128xf32>
    %25 = vector.extract_strided_slice %0 {offsets = [0, 4], sizes = [8, 1], strides = [1, 1]} : vector<8x6xf32> to vector<8x1xf32>
    %26 = vector.extract_strided_slice %1 {offsets = [4, 0], sizes = [1, 128], strides = [1, 1]} : vector<6x128xf32> to vector<1x128xf32>
    %27 = vector.broadcast %25 : vector<8x1xf32> to vector<8x128xf32>
    %28 = vector.broadcast %26 : vector<1x128xf32> to vector<8x128xf32>
    %29 = arith.mulf %27, %28 : vector<8x128xf32>
    %30 = arith.addf %24, %29 : vector<8x128xf32>
    %31 = vector.extract_strided_slice %0 {offsets = [0, 5], sizes = [8, 1], strides = [1, 1]} : vector<8x6xf32> to vector<8x1xf32>
    %32 = vector.extract_strided_slice %1 {offsets = [5, 0], sizes = [1, 128], strides = [1, 1]} : vector<6x128xf32> to vector<1x128xf32>
    %33 = vector.broadcast %31 : vector<8x1xf32> to vector<8x128xf32>
    %34 = vector.broadcast %32 : vector<1x128xf32> to vector<8x128xf32>
    %35 = arith.mulf %33, %34 : vector<8x128xf32>
    %36 = arith.addf %30, %35 : vector<8x128xf32>
    %c0_3 = arith.constant 0 : index
    %c0_4 = arith.constant 0 : index
    %37 = vector.load %arg3[%c0_3, %c0_4] : memref<1x128xf32, #tpu.memory_space<vmem>>, vector<1x128xf32>
    %38 = vector.broadcast %37 : vector<1x128xf32> to vector<8x128xf32>
    %39 = arith.addf %36, %38 : vector<8x128xf32>
    %cst = arith.constant 0.000000e+00 : f32
    %40 = vector.broadcast %cst : f32 to vector<8x128xf32>
    %41 = arith.maximumf %39, %40 : vector<8x128xf32>
    %42 = arith.truncf %41 : vector<8x128xf32> to vector<8x128xbf16>
    %c0_5 = arith.constant 0 : index
    %c0_6 = arith.constant 0 : index
    %43 = vector.load %arg4[%c0_5, %c0_6] : memref<128x64xbf16, #tpu.memory_space<vmem>>, vector<128x64xbf16>
    %cst_7 = arith.constant dense<0.000000e+00> : vector<8x64xf32>
    %44 = tpu.matmul %42, %43, %cst_7 {dimension_numbers = #tpu.dot_dimension_numbers<[1], [0], [0], [1], [0, 0, 1, 1], [], []>} : vector<8x128xbf16>, vector<128x64xbf16>, vector<8x64xf32> -> vector<8x64xf32>
    %c0_8 = arith.constant 0 : index
    %c0_9 = arith.constant 0 : index
    %45 = vector.load %arg5[%c0_8, %c0_9] : memref<1x64xf32, #tpu.memory_space<vmem>>, vector<1x64xf32>
    %46 = vector.broadcast %45 : vector<1x64xf32> to vector<8x64xf32>
    %47 = arith.addf %44, %46 : vector<8x64xf32>
    %cst_10 = arith.constant 0.000000e+00 : f32
    %48 = vector.broadcast %cst_10 : f32 to vector<8x64xf32>
    %49 = arith.maximumf %47, %48 : vector<8x64xf32>
    %50 = arith.truncf %49 : vector<8x64xf32> to vector<8x64xbf16>
    %c0_11 = arith.constant 0 : index
    %c0_12 = arith.constant 0 : index
    %51 = vector.load %arg6[%c0_11, %c0_12] : memref<64x128xbf16, #tpu.memory_space<vmem>>, vector<64x128xbf16>
    %cst_13 = arith.constant dense<0.000000e+00> : vector<8x128xf32>
    %52 = tpu.matmul %50, %51, %cst_13 {dimension_numbers = #tpu.dot_dimension_numbers<[1], [0], [0], [1], [0, 0, 1, 1], [], []>} : vector<8x64xbf16>, vector<64x128xbf16>, vector<8x128xf32> -> vector<8x128xf32>
    %c0_14 = arith.constant 0 : index
    %c0_15 = arith.constant 0 : index
    %53 = vector.load %arg7[%c0_14, %c0_15] : memref<1x128xf32, #tpu.memory_space<vmem>>, vector<1x128xf32>
    %54 = vector.broadcast %53 : vector<1x128xf32> to vector<8x128xf32>
    %55 = arith.addf %52, %54 : vector<8x128xf32>
    %c0_16 = arith.constant 0 : index
    %c0_17 = arith.constant 0 : index
    %56 = vector.load %arg8[%c0_16, %c0_17] : memref<8x128xf32, #tpu.memory_space<vmem>>, vector<8x128xf32>
    tpu.vector_store %arg8[%c0_16, %c0_17], %55 {strides = array<i32>} : memref<8x128xf32, #tpu.memory_space<vmem>>, vector<8x128xf32>,
    return
  }
  func.func @transform_0(%arg0: i32) -> (i32, i32) {
    %c0_i32 = arith.constant 0 : i32
    %c0_i32_0 = arith.constant 0 : i32
    return %arg0, %c0_i32 : i32, i32
  }
  func.func @transform_1(%arg0: i32) -> (i32, i32) {
    %c0_i32 = arith.constant 0 : i32
    %c0_i32_0 = arith.constant 0 : i32
    %c0_i32_1 = arith.constant 0 : i32
    return %c0_i32, %c0_i32_0 : i32, i32
  }
  func.func @transform_2(%arg0: i32) -> (i32, i32) {
    %c0_i32 = arith.constant 0 : i32
    %c0_i32_0 = arith.constant 0 : i32
    %c0_i32_1 = arith.constant 0 : i32
    return %c0_i32, %c0_i32_0 : i32, i32
  }
  func.func @transform_3(%arg0: i32) -> (i32, i32) {
    %c0_i32 = arith.constant 0 : i32
    %c0_i32_0 = arith.constant 0 : i32
    %c0_i32_1 = arith.constant 0 : i32
    return %c0_i32, %c0_i32_0 : i32, i32
  }
  func.func @transform_4(%arg0: i32) -> (i32, i32) {
    %c0_i32 = arith.constant 0 : i32
    %c0_i32_0 = arith.constant 0 : i32
    %c0_i32_1 = arith.constant 0 : i32
    return %c0_i32, %c0_i32_0 : i32, i32
  }
  func.func @transform_5(%arg0: i32) -> (i32, i32) {
    %c0_i32 = arith.constant 0 : i32
    %c0_i32_0 = arith.constant 0 : i32
    %c0_i32_1 = arith.constant 0 : i32
    return %c0_i32, %c0_i32_0 : i32, i32
  }
  func.func @transform_6(%arg0: i32) -> (i32, i32) {
    %c0_i32 = arith.constant 0 : i32
    %c0_i32_0 = arith.constant 0 : i32
    %c0_i32_1 = arith.constant 0 : i32
    return %c0_i32, %c0_i32_0 : i32, i32
  }
  func.func @transform_7(%arg0: i32) -> (i32, i32) {
    %c0_i32 = arith.constant 0 : i32
    %c0_i32_0 = arith.constant 0 : i32
    return %arg0, %c0_i32 : i32, i32
  }
}

</mosaic_0001>

<llo_original>
// kernel: tpu_custom_call.1
$region0: #{tpu_custom_call.1}
  #allocation0 [shape = 'u32[]', space=smem, size = 0x4, offset = 0x4, fixed_abs, tag = 'smem constant byte address 0x4 - core index']
  #allocation1 [shape = 'u32[144,128]{1,0:T(1,128)}', space=vmem, size = 0x12000, scoped, tag = 'internal scratch']
  %s0 = inlined_call_operand.vmem [shape: f32[8,6], index: 0, kind: input, shape index: {}]
  %s1 = inlined_call_operand.vmem [shape: f32[6,128], index: 1, kind: input, shape index: {}]
  %s2 = inlined_call_operand.vmem [shape: f32[1,128], index: 2, kind: input, shape index: {}]
  %s3 = inlined_call_operand.vmem [shape: bf16[128,64], index: 3, kind: input, shape index: {}]
  %s4 = inlined_call_operand.vmem [shape: f32[1,64], index: 4, kind: input, shape index: {}]
  %s5 = inlined_call_operand.vmem [shape: bf16[64,128], index: 5, kind: input, shape index: {}]
  %s6 = inlined_call_operand.vmem [shape: f32[1,128], index: 6, kind: input, shape index: {}]
  %s7 = inlined_call_operand.hbm [shape: f32[8,128], index: 7, kind: output, shape index: {}]
  %s8 = sld [smem:[#allocation0]]
  $region38: #{tpu_custom_call.1} parent=0
    _
  %s10 = ssub.s32 1, %s8
  %s11 = scalar_select 0, %s10, %s8
  $region1: #{tpu_custom_call.1} parent=0
    #allocation2 [shape = 'u8[4096]{0}', space=vmem, size = 0x1000, scoped, tag = 'output window, operand 0, single buffered']
    #allocation3 [shape = 's32[1]{0}', space=sflag, size = 0x4, scoped, tag = 'scoped memory for tpu_custom_call.1']
    %12 = vsyncpa [#allocation3], 0
    // Predicated region
    $region2: #{tpu_custom_call.1} parent=1 // pred_check
      _
    $region3: #{tpu_custom_call.1} parent=1 // pred_check_branch
      %14 = sbr.rel (0) target = $region5
    $region4: #{tpu_custom_call.1} parent=1 // pred_region
      _
    $region5: #{tpu_custom_call.1} parent=1 // pred_fallthru
      _
    // Predicated region
    $region6: #{tpu_custom_call.1} parent=1 // pred_check
      _
    $region7: #{tpu_custom_call.1} parent=1 // pred_check_branch
      %16 = sbr.rel (0) target = $region9
    $region8: #{tpu_custom_call.1} parent=1 // pred_region
      _
    $region9: #{tpu_custom_call.1} parent=1 // pred_fallthru
      _
    // Predicated region
    $region10: #{tpu_custom_call.1} parent=1 // pred_check
      _
    $region11: #{tpu_custom_call.1} parent=1 // pred_check_branch
      %18 = sbr.rel (0) target = $region13
    $region12: #{tpu_custom_call.1} parent=1 // pred_region
      _
    $region13: #{tpu_custom_call.1} parent=1 // pred_fallthru
      _
    // Predicated region
    $region14: #{tpu_custom_call.1} parent=1 // pred_check
      _
    $region15: #{tpu_custom_call.1} parent=1 // pred_check_branch
      %20 = sbr.rel (0) target = $region17
    $region16: #{tpu_custom_call.1} parent=1 // pred_region
      _
    $region17: #{tpu_custom_call.1} parent=1 // pred_fallthru
      _
    // Predicated region
    $region18: #{tpu_custom_call.1} parent=1 // pred_check
      _
    $region19: #{tpu_custom_call.1} parent=1 // pred_check_branch
      %22 = sbr.rel (0) target = $region21
    $region20: #{tpu_custom_call.1} parent=1 // pred_region
      _
    $region21: #{tpu_custom_call.1} parent=1 // pred_fallthru
      _
    // Predicated region
    $region22: #{tpu_custom_call.1} parent=1 // pred_check
      _
    $region23: #{tpu_custom_call.1} parent=1 // pred_check_branch
      %24 = sbr.rel (0) target = $region25
    $region24: #{tpu_custom_call.1} parent=1 // pred_region
      _
    $region25: #{tpu_custom_call.1} parent=1 // pred_fallthru
      _
    // Predicated region
    $region26: #{tpu_custom_call.1} parent=1 // pred_check
      _
    $region27: #{tpu_custom_call.1} parent=1 // pred_check_branch
      %26 = sbr.rel (0) target = $region29
    $region28: #{tpu_custom_call.1} parent=1 // pred_region
      _
    $region29: #{tpu_custom_call.1} parent=1 // pred_fallthru
      _
    %v28 = vld [vmem:[%s0] sm:$0xff]
    %v29 = vld [vmem:[%s1] sm:$0x3f]
    %31 = vset.pattern.permute.xlu0 0
    %32 = vperm.xlu0 %31, %v28
    %v33 = vpop.permute.xlu0 %32
    %v35 = vlaneseq
    %v36 = vshrl.u32 %v35, 7
    %v37 = vsub.s32 0, %v36
    %v38 = vrot.slane %v29, %v37
    %v39 = vmul.f32 %v33, %v38
    %40 = vset.pattern.permute.xlu0 1
    %41 = vperm.xlu0 %40, %v28
    %v42 = vpop.permute.xlu0 %41
    %v44 = vlaneseq
    %v45 = vshrl.u32 %v44, 7
    %v46 = vsub.s32 1, %v45
    %v47 = vrot.slane %v29, %v46
    %v48 = vmul.f32 %v42, %v47
    %v49 = vadd.f32 %v39, %v48
    %50 = vset.pattern.permute.xlu0 2
    %51 = vperm.xlu0 %50, %v28
    %v52 = vpop.permute.xlu0 %51
    %v54 = vlaneseq
    %v55 = vshrl.u32 %v54, 7
    %v56 = vsub.s32 2, %v55
    %v57 = vrot.slane %v29, %v56
    %v58 = vmul.f32 %v52, %v57
    %v59 = vadd.f32 %v49, %v58
    %60 = vset.pattern.permute.xlu0 3
    %61 = vperm.xlu0 %60, %v28
    %v62 = vpop.permute.xlu0 %61
    %v64 = vlaneseq
    %v65 = vshrl.u32 %v64, 7
    %v66 = vsub.s32 3, %v65
    %v67 = vrot.slane %v29, %v66
    %v68 = vmul.f32 %v62, %v67
    %v69 = vadd.f32 %v59, %v68
    %70 = vset.pattern.permute.xlu0 4
    %71 = vperm.xlu0 %70, %v28
    %v72 = vpop.permute.xlu0 %71
    %v74 = vlaneseq
    %v75 = vshrl.u32 %v74, 7
    %v76 = vsub.s32 4, %v75
    %v77 = vrot.slane %v29, %v76
    %v78 = vmul.f32 %v72, %v77
    %v79 = vadd.f32 %v69, %v78
    %80 = vset.pattern.permute.xlu0 5
    %81 = vperm.xlu0 %80, %v28
    %v82 = vpop.permute.xlu0 %81
    %v84 = vlaneseq
    %v85 = vshrl.u32 %v84, 7
    %v86 = vsub.s32 5, %v85
    %v87 = vrot.slane %v29, %v86
    %v88 = vmul.f32 %v82, %v87
    %v89 = vadd.f32 %v79, %v88
    %v90 = vld [vmem:[%s2] sm:$0x1]
    %v92 = vlaneseq
    %v93 = vshrl.u32 %v92, 7
    %v94 = vsub.s32 0, %v93
    %v95 = vrot.slane %v90, %v94
    %v97 = vadd.f32 %v89, %v95
    %v98 = vmax.f32 %v97, 0.0
    %v99 = vpack.c.bf16 %v98, %v98
    %v100 = vld [vmem:[%s3] sm:$0xf]
    %v101 = vld [vmem:[%s3 + $0x4] sm:$0xf]
    %v102 = vld [vmem:[%s3 + $0x8] sm:$0xf]
    %v103 = vld [vmem:[%s3 + $0xc] sm:$0xf]
    %v104 = vld [vmem:[%s3 + $0x10] sm:$0xf]
    %v105 = vld [vmem:[%s3 + $0x14] sm:$0xf]
    %v106 = vld [vmem:[%s3 + $0x18] sm:$0xf]
    %v107 = vld [vmem:[%s3 + $0x1c] sm:$0xf]
    %v108 = vld [vmem:[%s3 + $0x20] sm:$0xf]
    %v109 = vld [vmem:[%s3 + $0x24] sm:$0xf]
    %v110 = vld [vmem:[%s3 + $0x28] sm:$0xf]
    %v111 = vld [vmem:[%s3 + $0x2c] sm:$0xf]
    %v112 = vld [vmem:[%s3 + $0x30] sm:$0xf]
    %v113 = vld [vmem:[%s3 + $0x34] sm:$0xf]
    %v114 = vld [vmem:[%s3 + $0x38] sm:$0xf]
    %v115 = vld [vmem:[%s3 + $0x3c] sm:$0xf]
    %v116 = vld [vmem:[%s4] sm:$0x1]
    %v118 = vlaneseq
    %v119 = vshrl.u32 %v118, 7
    %v120 = vsub.s32 0, %v119
    %v121 = vrot.slane %v116, %v120
    %v139 = vunpack.c.l.b16 %v100
    %v140 = vunpack.c.l.b16 %v101
    %v141 = vunpack.c.l.b16 %v102
    %v142 = vunpack.c.l.b16 %v103
    %v143 = vunpack.c.l.b16 %v104
    %v144 = vunpack.c.l.b16 %v105
    %v145 = vunpack.c.l.b16 %v106
    %v146 = vunpack.c.l.b16 %v107
    %v147 = vunpack.c.l.b16 %v108
    %v148 = vunpack.c.l.b16 %v109
    %v149 = vunpack.c.l.b16 %v110
    %v150 = vunpack.c.l.b16 %v111
    %v151 = vunpack.c.l.b16 %v112
    %v152 = vunpack.c.l.b16 %v113
    %v153 = vunpack.c.l.b16 %v114
    %v154 = vunpack.c.l.b16 %v115
    %v155 = vpack.c.b16 %v140, %v139
    %v156 = vpack.c.b16 %v142, %v141
    %v157 = vpack.c.b16 %v144, %v143
    %v158 = vpack.c.b16 %v146, %v145
    %v159 = vpack.c.b16 %v148, %v147
    %v160 = vpack.c.b16 %v150, %v149
    %v161 = vpack.c.b16 %v152, %v151
    %v162 = vpack.c.b16 %v154, %v153
    %171 = vmatprep.subr.bf16.mxu0 0
    %172 = vmatpush1.bf16.msra.mxu0 %v155
    %173 = vmatprep.subr.bf16.mxu0 0
    %174 = vmatpush1.bf16.msra.mxu0 %v156
    %175 = vmatprep.subr.bf16.mxu0 0
    %176 = vmatpush1.bf16.msra.mxu0 %v157
    %177 = vmatprep.subr.bf16.mxu0 0
    %178 = vmatpush1.bf16.msra.mxu0 %v158
    %179 = vmatprep.subr.bf16.mxu0 0
    %180 = vmatpush1.bf16.msra.mxu0 %v159
    %181 = vmatprep.subr.bf16.mxu0 0
    %182 = vmatpush1.bf16.msra.mxu0 %v160
    %183 = vmatprep.subr.bf16.mxu0 0
    %184 = vmatpush1.bf16.msra.mxu0 %v161
    %185 = vmatprep.subr.bf16.mxu0 0
    %186 = vmatpush1.bf16.msra.mxu0 %v162
    %187 = vmatprep.subr.bf16.mxu0 0
    %188 = vmatpush1.bf16.msra.mxu0 0
    %189 = vmatprep.subr.bf16.mxu0 0
    %190 = vmatpush1.bf16.msra.mxu0 0
    %191 = vmatprep.subr.bf16.mxu0 0
    %192 = vmatpush1.bf16.msra.mxu0 0
    %193 = vmatprep.subr.bf16.mxu0 0
    %194 = vmatpush1.bf16.msra.mxu0 0
    %195 = vmatprep.subr.bf16.mxu0 0
    %196 = vmatpush1.bf16.msra.mxu0 0
    %197 = vmatprep.subr.bf16.mxu0 0
    %198 = vmatpush1.bf16.msra.mxu0 0
    %199 = vmatprep.subr.bf16.mxu0 0
    %200 = vmatpush1.bf16.msra.mxu0 0
    %201 = vmatprep.subr.bf16.mxu0 0
    %202 = vmatpush1.bf16.msra.mxu0 0
    %203 = vmatprep.mubr.bf16.mxu0 0
    %204 = vmatmul.mubr.bf16.gmra.mrb[0].mxu0 %v99
    %v205 = vpop.f32.mrb[0].mxu0
    %v206 = vadd.f32 %v121, %v205
    %v207 = vpop.f32.mrb[0].mxu0
    %v208 = vpop.f32.mrb[0].mxu0
    %v209 = vpop.f32.mrb[0].mxu0
    %210 = vdwg.mxu0
    %v211 = vmax.f32 %v206, 0.0
    %v212 = vpack.c.bf16 %v211, %v211
    %v213 = vld [vmem:[%s5] sm:$0xf]
    %v214 = vld [vmem:[%s5 + $0x4] sm:$0xf]
    %v215 = vld [vmem:[%s5 + $0x8] sm:$0xf]
    %v216 = vld [vmem:[%s5 + $0xc] sm:$0xf]
    %v217 = vld [vmem:[%s5 + $0x10] sm:$0xf]
    %v218 = vld [vmem:[%s5 + $0x14] sm:$0xf]
    %v219 = vld [vmem:[%s5 + $0x18] sm:$0xf]
    %v220 = vld [vmem:[%s5 + $0x1c] sm:$0xf]
    %v221 = vld [vmem:[%s6] sm:$0x1]
    %v223 = vlaneseq
    %v224 = vshrl.u32 %v223, 7
    %v225 = vsub.s32 0, %v224
    %v226 = vrot.slane %v221, %v225
    %v236 = vunpack.c.l.b16 %v213
    %v237 = vunpack.c.l.b16 %v214
    %v238 = vunpack.c.l.b16 %v215
    %v239 = vunpack.c.l.b16 %v216
    %v240 = vunpack.c.l.b16 %v217
    %v241 = vunpack.c.l.b16 %v218
    %v242 = vunpack.c.l.b16 %v219
    %v243 = vunpack.c.l.b16 %v220
    %v244 = vpack.c.b16 %v237, %v236
    %v245 = vpack.c.b16 %v239, %v238
    %v246 = vpack.c.b16 %v241, %v240
    %v247 = vpack.c.b16 %v243, %v242
    %vm252 = vcmask 523264
    %v254 = vsel %vm252, %v212, 0
    %256 = vmatprep.subr.bf16.mxu0 0
    %257 = vmatpush1.bf16.msra.mxu0 %v244
    %258 = vmatprep.subr.bf16.mxu0 0
    %259 = vmatpush1.bf16.msra.mxu0 %v245
    %260 = vmatprep.subr.bf16.mxu0 0
    %261 = vmatpush1.bf16.msra.mxu0 %v246
    %262 = vmatprep.subr.bf16.mxu0 0
    %263 = vmatpush1.bf16.msra.mxu0 %v247
    %264 = vmatprep.subr.bf16.mxu0 0
    %265 = vmatpush1.bf16.msra.mxu0 0
    %266 = vmatprep.subr.bf16.mxu0 0
    %267 = vmatpush1.bf16.msra.mxu0 0
    %268 = vmatprep.subr.bf16.mxu0 0
    %269 = vmatpush1.bf16.msra.mxu0 0
    %270 = vmatprep.subr.bf16.mxu0 0
    %271 = vmatpush1.bf16.msra.mxu0 0
    %272 = vmatprep.subr.bf16.mxu0 0
    %273 = vmatpush1.bf16.msra.mxu0 0
    %274 = vmatprep.subr.bf16.mxu0 0
    %275 = vmatpush1.bf16.msra.mxu0 0
    %276 = vmatprep.subr.bf16.mxu0 0
    %277 = vmatpush1.bf16.msra.mxu0 0
    %278 = vmatprep.subr.bf16.mxu0 0
    %279 = vmatpush1.bf16.msra.mxu0 0
    %280 = vmatprep.subr.bf16.mxu0 0
    %281 = vmatpush1.bf16.msra.mxu0 0
    %282 = vmatprep.subr.bf16.mxu0 0
    %283 = vmatpush1.bf16.msra.mxu0 0
    %284 = vmatprep.subr.bf16.mxu0 0
    %285 = vmatpush1.bf16.msra.mxu0 0
    %286 = vmatprep.subr.bf16.mxu0 0
    %287 = vmatpush1.bf16.msra.mxu0 0
    %288 = vmatprep.mubr.bf16.mxu0 0
    %289 = vmatmul.mubr.bf16.gmra.mrb[0].mxu0 %v254
    %v290 = vpop.f32.mrb[0].mxu0
    %v291 = vadd.f32 %v226, %v290
    %v292 = vpop.f32.mrb[0].mxu0
    %v293 = vpop.f32.mrb[0].mxu0
    %v294 = vpop.f32.mrb[0].mxu0
    %295 = vdwg.mxu0
    %296 = vst [vmem:[#allocation2] sm:$0xff] %v291
    // Predicated region
    $region30: #{tpu_custom_call.1} parent=1 // pred_check
      _
    $region31: #{tpu_custom_call.1} parent=1 // pred_check_branch
      %298 = sbr.rel (0) target = $region33
    $region32: #{tpu_custom_call.1} parent=1 // pred_region
      %s300 = ssub.s32 128, 128
      %301 = vsyncadd [#allocation3], %s300
      %s303 = sshll.u32 [#allocation2], 4
      %s304 = int_to_ptr.vmem [resolvable:$true] %s303
      %306 = dma.vmem_to_hbm [thread:$0]  %s304, 128, %s7, [#allocation3]
    $region33: #{tpu_custom_call.1} parent=1 // pred_fallthru
      _
    // Predicated region
    $region34: #{tpu_custom_call.1} parent=1 // pred_check
      _
    $region35: #{tpu_custom_call.1} parent=1 // pred_check_branch
      %308 = sbr.rel (0) target = $region37
    $region36: #{tpu_custom_call.1} parent=1 // pred_region
      %309 = dma.done [#allocation3], 128
    $region37: #{tpu_custom_call.1} parent=1 // pred_fallthru
      _
    %310 = vsyncpa [#allocation3], 1

</llo_original>
